<compile_context>
chip_gen: v7x
topology: tpu7x:2x2x1
jax: 0.10.0
libtpu: 0.0.40
codegen_flags: <defaults>
</compile_context>

<pallas_src>
import jax
import jax.numpy as jnp
from jax.experimental import pallas as pl
from jax.experimental.pallas import tpu as pltpu


def mlp_kernel(x_ref, w1_ref, b1_ref, w2_ref, b2_ref, o_ref):
    # Layer 1: Linear(in_dim, 8) + ReLU   (f32 accumulate)
    h = jnp.dot(x_ref[...], w1_ref[...], preferred_element_type=jnp.float32)
    h = jnp.maximum(h + b1_ref[...], 0.0)          # (TB, 8) + (1, 8) broadcast
    # Layer 2: Linear(8, out_dim) + ReLU
    y = jnp.dot(h, w2_ref[...], preferred_element_type=jnp.float32)
    o_ref[...] = jnp.maximum(y + b2_ref[...], 0.0).astype(o_ref.dtype)


def my_model_forward(x, w1, b1, w2, b2, *, batch_tile=1024):
    """x: (B, in_dim) f32 -> (B, out_dim) f32."""
    batch, in_dim = x.shape
    hidden = w1.shape[1]
    out_dim = w2.shape[1]

    if batch <= batch_tile:
        # Launch-latency-bound regime: whole problem in one block, no grid,
        # no pipelining (per-grid-step overhead ~0.35 us would dominate).
        return pl.pallas_call(
            mlp_kernel,
            out_shape=jax.ShapeDtypeStruct((batch, out_dim), jnp.float32),
            in_specs=[pl.BlockSpec(memory_space=pltpu.VMEM)] * 5,
            out_specs=pl.BlockSpec(memory_space=pltpu.VMEM),
        )(x, w1, b1, w2, b2)

    # Large-batch streaming path: 1-D grid over batch.
    padded = pl.cdiv(batch, batch_tile) * batch_tile
    if padded != batch:
        x = jnp.pad(x, ((0, padded - batch), (0, 0)))
    grid = (padded // batch_tile,)

    # TODO(synk): for very large batch a lane-dense (out_dim, B) transposed
    # output slab would avoid masked vst on the 4-wide output; kept row-major
    # here to preserve the module's (B, out_dim) contract without a wrapper
    # transpose.
    out = pl.pallas_call(
        mlp_kernel,
        out_shape=jax.ShapeDtypeStruct((padded, out_dim), jnp.float32),
        grid=grid,
        in_specs=[
            pl.BlockSpec((batch_tile, in_dim), lambda i: (i, 0)),   # x: streamed
            pl.BlockSpec((in_dim, hidden), lambda i: (0, 0)),       # w1: resident
            pl.BlockSpec((1, hidden), lambda i: (0, 0)),            # b1: resident
            pl.BlockSpec((hidden, out_dim), lambda i: (0, 0)),      # w2: resident
            pl.BlockSpec((1, out_dim), lambda i: (0, 0)),           # b2: resident
        ],
        out_specs=pl.BlockSpec((batch_tile, out_dim), lambda i: (i, 0)),
        compiler_params=pltpu.CompilerParams(
            # "parallel" lets v7x shard the batch axis across its 2 TCs;
            # harmless (no-op) on v5e/v6e.
            dimension_semantics=("parallel",),
        ),
    )(x, w1, b1, w2, b2)
    return out[:batch]


def init_params(key, in_dim=3, hidden=8, out_dim=4):
    """Deterministic init mimicking nn.Linear's uniform(-1/sqrt(fan_in), +...)."""
    k1, k2, k3, k4 = jax.random.split(key, 4)
    bound1 = 1.0 / jnp.sqrt(in_dim)
    bound2 = 1.0 / jnp.sqrt(hidden)
    # Stored as (in_features, out_features) == torch weight transposed.
    w1 = jax.random.uniform(k1, (in_dim, hidden), jnp.float32, -bound1, bound1)
    b1 = jax.random.uniform(k2, (1, hidden), jnp.float32, -bound1, bound1)
    w2 = jax.random.uniform(k3, (hidden, out_dim), jnp.float32, -bound2, bound2)
    b2 = jax.random.uniform(k4, (1, out_dim), jnp.float32, -bound2, bound2)
    return w1, b1, w2, b2


def reference_forward(x, w1, b1, w2, b2):
    h = jnp.maximum(x @ w1 + b1, 0.0)
    return jnp.maximum(h @ w2 + b2, 0.0)


if __name__ == "__main__":
    key = jax.random.PRNGKey(0)
    kp, kx_small, kx_big = jax.random.split(key, 3)

    in_dim, hidden, out_dim = 3, 8, 4
    w1, b1, w2, b2 = init_params(kp, in_dim, hidden, out_dim)

    # ---- small-batch path (what MyModel's tests exercise: torch.rand(B, 3)) ----
    batch = 8
    x = jax.random.uniform(kx_small, (batch, in_dim), jnp.float32)
    out = jax.block_until_ready(my_model_forward(x, w1, b1, w2, b2))
    ref = reference_forward(x, w1, b1, w2, b2)
    assert out.shape == (batch, out_dim), out.shape
    assert jnp.allclose(out, ref, atol=1e-5, rtol=1e-5), "small-batch mismatch"

    # ---- large-batch (gridded, streaming) path sanity check ----
    big_batch = 4096
    xb = jax.random.uniform(kx_big, (big_batch, in_dim), jnp.float32)
    out_b = jax.block_until_ready(
        my_model_forward(xb, w1, b1, w2, b2, batch_tile=1024)
    )
    ref_b = reference_forward(xb, w1, b1, w2, b2)
    assert out_b.shape == (big_batch, out_dim), out_b.shape
    assert jnp.allclose(out_b, ref_b, atol=1e-5, rtol=1e-5), "large-batch mismatch"

    print("KERNEL_OK")
</pallas_src>

<mosaic_0001>
module attributes {stable_mosaic.version = 11 : i64} {
  func.func @mlp_kernel(%arg0: memref<8x3xf32, #tpu.memory_space<vmem>>, %arg1: memref<3x8xf32, #tpu.memory_space<vmem>>, %arg2: memref<1x8xf32, #tpu.memory_space<vmem>>, %arg3: memref<8x4xf32, #tpu.memory_space<vmem>>, %arg4: memref<1x4xf32, #tpu.memory_space<vmem>>, %arg5: memref<8x4xf32, #tpu.memory_space<vmem>>) attributes {dimension_semantics = [], scalar_prefetch = 0 : i64, scratch_operands = 0 : i64, tpu.core_type = #tpu.core_type<tc>} {
    %c0 = arith.constant 0 : index
    %c0_0 = arith.constant 0 : index
    %0 = vector.load %arg0[%c0, %c0_0] : memref<8x3xf32, #tpu.memory_space<vmem>>, vector<8x3xf32>
    %c0_1 = arith.constant 0 : index
    %c0_2 = arith.constant 0 : index
    %1 = vector.load %arg1[%c0_1, %c0_2] : memref<3x8xf32, #tpu.memory_space<vmem>>, vector<3x8xf32>
    %cst = arith.constant dense<0.000000e+00> : vector<8x8xf32>
    %2 = tpu.matmul %0, %1, %cst {dimension_numbers = #tpu.dot_dimension_numbers<[1], [0], [0], [1], [0, 0, 1, 1], [], []>} : vector<8x3xf32>, vector<3x8xf32>, vector<8x8xf32> -> vector<8x8xf32>
    %c0_3 = arith.constant 0 : index
    %c0_4 = arith.constant 0 : index
    %3 = vector.load %arg2[%c0_3, %c0_4] : memref<1x8xf32, #tpu.memory_space<vmem>>, vector<1x8xf32>
    %4 = vector.broadcast %3 : vector<1x8xf32> to vector<8x8xf32>
    %5 = arith.addf %2, %4 : vector<8x8xf32>
    %cst_5 = arith.constant 0.000000e+00 : f32
    %6 = vector.broadcast %cst_5 : f32 to vector<8x8xf32>
    %7 = arith.maximumf %5, %6 : vector<8x8xf32>
    %c0_6 = arith.constant 0 : index
    %c0_7 = arith.constant 0 : index
    %8 = vector.load %arg3[%c0_6, %c0_7] : memref<8x4xf32, #tpu.memory_space<vmem>>, vector<8x4xf32>
    %cst_8 = arith.constant dense<0.000000e+00> : vector<8x4xf32>
    %9 = tpu.matmul %7, %8, %cst_8 {dimension_numbers = #tpu.dot_dimension_numbers<[1], [0], [0], [1], [0, 0, 1, 1], [], []>} : vector<8x8xf32>, vector<8x4xf32>, vector<8x4xf32> -> vector<8x4xf32>
    %c0_9 = arith.constant 0 : index
    %c0_10 = arith.constant 0 : index
    %10 = vector.load %arg4[%c0_9, %c0_10] : memref<1x4xf32, #tpu.memory_space<vmem>>, vector<1x4xf32>
    %11 = vector.broadcast %10 : vector<1x4xf32> to vector<8x4xf32>
    %12 = arith.addf %9, %11 : vector<8x4xf32>
    %cst_11 = arith.constant 0.000000e+00 : f32
    %13 = vector.broadcast %cst_11 : f32 to vector<8x4xf32>
    %14 = arith.maximumf %12, %13 : vector<8x4xf32>
    %c0_12 = arith.constant 0 : index
    %c0_13 = arith.constant 0 : index
    %15 = vector.load %arg5[%c0_12, %c0_13] : memref<8x4xf32, #tpu.memory_space<vmem>>, vector<8x4xf32>
    tpu.vector_store %arg5[%c0_12, %c0_13], %14 {strides = array<i32>} : memref<8x4xf32, #tpu.memory_space<vmem>>, vector<8x4xf32>,
    return
  }
}

</mosaic_0001>

<llo_original>
// kernel: tpu_custom_call.1
$region0: #{tpu_custom_call.1}
  #allocation0 [shape = 'u32[]', space=smem, size = 0x4, offset = 0x4, fixed_abs, tag = 'smem constant byte address 0x4 - core index']
  #allocation1 [shape = 'u32[144,128]{1,0:T(1,128)}', space=vmem, size = 0x12000, scoped, tag = 'internal scratch']
  %s0 = inlined_call_operand.vmem [shape: f32[8,3], index: 0, kind: input, shape index: {}]
  %s1 = inlined_call_operand.vmem [shape: f32[3,8], index: 1, kind: input, shape index: {}]
  %s2 = inlined_call_operand.vmem [shape: f32[1,8], index: 2, kind: input, shape index: {}]
  %s3 = inlined_call_operand.vmem [shape: f32[8,4], index: 3, kind: input, shape index: {}]
  %s4 = inlined_call_operand.vmem [shape: f32[1,4], index: 4, kind: input, shape index: {}]
  %s5 = inlined_call_operand.vmem [shape: f32[8,4], index: 5, kind: output, shape index: {}]
  %s6 = sld [smem:[#allocation0]]
  $region30: #{tpu_custom_call.1} parent=0
    _
  %s8 = ssub.s32 1, %s6
  %s9 = scalar_select 0, %s8, %s6
  // Predicated region
  $region2: #{tpu_custom_call.1} parent=0 // pred_check
    _
  $region3: #{tpu_custom_call.1} parent=0 // pred_check_branch
    %11 = sbr.rel (0) target = $region5
  $region4: #{tpu_custom_call.1} parent=0 // pred_region
    _
  $region5: #{tpu_custom_call.1} parent=0 // pred_fallthru
    _
  // Predicated region
  $region6: #{tpu_custom_call.1} parent=0 // pred_check
    _
  $region7: #{tpu_custom_call.1} parent=0 // pred_check_branch
    %13 = sbr.rel (0) target = $region9
  $region8: #{tpu_custom_call.1} parent=0 // pred_region
    _
  $region9: #{tpu_custom_call.1} parent=0 // pred_fallthru
    _
  // Predicated region
  $region10: #{tpu_custom_call.1} parent=0 // pred_check
    _
  $region11: #{tpu_custom_call.1} parent=0 // pred_check_branch
    %15 = sbr.rel (0) target = $region13
  $region12: #{tpu_custom_call.1} parent=0 // pred_region
    _
  $region13: #{tpu_custom_call.1} parent=0 // pred_fallthru
    _
  // Predicated region
  $region14: #{tpu_custom_call.1} parent=0 // pred_check
    _
  $region15: #{tpu_custom_call.1} parent=0 // pred_check_branch
    %17 = sbr.rel (0) target = $region17
  $region16: #{tpu_custom_call.1} parent=0 // pred_region
    _
  $region17: #{tpu_custom_call.1} parent=0 // pred_fallthru
    _
  // Predicated region
  $region18: #{tpu_custom_call.1} parent=0 // pred_check
    _
  $region19: #{tpu_custom_call.1} parent=0 // pred_check_branch
    %19 = sbr.rel (0) target = $region21
  $region20: #{tpu_custom_call.1} parent=0 // pred_region
    _
  $region21: #{tpu_custom_call.1} parent=0 // pred_fallthru
    _
  %v20 = vld [vmem:[%s0] sm:$0xff]
  %v21 = vld [vmem:[%s1] sm:$0x7]
  %v22 = vld [vmem:[%s2] sm:$0x1]
  %v24 = vlaneseq
  %v25 = vshrl.u32 %v24, 7
  %v26 = vsub.s32 0, %v25
  %v27 = vrot.slane %v22, %v26
  %vm29 = vcmask 23552
  %v31 = vsel %vm29, %v20, 0
  %vm33 = vcmask 1042432
  %v35 = vsel %vm33, %v21, 0
  %37 = vmatprep.subr.mxu0 0.0
  %38 = vmatpush1.msra.mxu0 %v35
  %39 = vmatprep.subr.mxu0 0.0
  %40 = vmatpush1.msra.mxu0 0.0
  %41 = vmatprep.subr.mxu0 0.0
  %42 = vmatpush1.msra.mxu0 0.0
  %43 = vmatprep.subr.mxu0 0.0
  %44 = vmatpush1.msra.mxu0 0.0
  %45 = vmatprep.subr.mxu0 0.0
  %46 = vmatpush1.msra.mxu0 0.0
  %47 = vmatprep.subr.mxu0 0.0
  %48 = vmatpush1.msra.mxu0 0.0
  %49 = vmatprep.subr.mxu0 0.0
  %50 = vmatpush1.msra.mxu0 0.0
  %51 = vmatprep.subr.mxu0 0.0
  %52 = vmatpush1.msra.mxu0 0.0
  %53 = vmatprep.subr.mxu0 0.0
  %54 = vmatpush1.msra.mxu0 0.0
  %55 = vmatprep.subr.mxu0 0.0
  %56 = vmatpush1.msra.mxu0 0.0
  %57 = vmatprep.subr.mxu0 0.0
  %58 = vmatpush1.msra.mxu0 0.0
  %59 = vmatprep.subr.mxu0 0.0
  %60 = vmatpush1.msra.mxu0 0.0
  %61 = vmatprep.subr.mxu0 0.0
  %62 = vmatpush1.msra.mxu0 0.0
  %63 = vmatprep.subr.mxu0 0.0
  %64 = vmatpush1.msra.mxu0 0.0
  %65 = vmatprep.subr.mxu0 0.0
  %66 = vmatpush1.msra.mxu0 0.0
  %67 = vmatprep.subr.mxu0 0.0
  %68 = vmatpush1.msra.mxu0 0.0
  %69 = vmatprep.subr.mxu0 0.0
  %70 = vmatpush1.msra.mxu0 0.0
  %71 = vmatprep.subr.mxu0 0.0
  %72 = vmatpush1.msra.mxu0 0.0
  %73 = vmatprep.subr.mxu0 0.0
  %74 = vmatpush1.msra.mxu0 0.0
  %75 = vmatprep.subr.mxu0 0.0
  %76 = vmatpush1.msra.mxu0 0.0
  %77 = vmatprep.subr.mxu0 0.0
  %78 = vmatpush1.msra.mxu0 0.0
  %79 = vmatprep.subr.mxu0 0.0
  %80 = vmatpush1.msra.mxu0 0.0
  %81 = vmatprep.subr.mxu0 0.0
  %82 = vmatpush1.msra.mxu0 0.0
  %83 = vmatprep.subr.mxu0 0.0
  %84 = vmatpush1.msra.mxu0 0.0
  %85 = vmatprep.subr.mxu0 0.0
  %86 = vmatpush1.msra.mxu0 0.0
  %87 = vmatprep.subr.mxu0 0.0
  %88 = vmatpush1.msra.mxu0 0.0
  %89 = vmatprep.subr.mxu0 0.0
  %90 = vmatpush1.msra.mxu0 0.0
  %91 = vmatprep.subr.mxu0 0.0
  %92 = vmatpush1.msra.mxu0 0.0
  %93 = vmatprep.subr.mxu0 0.0
  %94 = vmatpush1.msra.mxu0 0.0
  %95 = vmatprep.subr.mxu0 0.0
  %96 = vmatpush1.msra.mxu0 0.0
  %97 = vmatprep.subr.mxu0 0.0
  %98 = vmatpush1.msra.mxu0 0.0
  %99 = vmatprep.subr.mxu0 0.0
  %100 = vmatpush1.msra.mxu0 0.0
  %101 = vmatprep.mubr.f32.mxu0 0.0
  %102 = vmatmul.mubr.f32.gmra.mrb[0].mxu0 %v31
  %v103 = vpop.f32.mrb[0].mxu0
  %v104 = vadd.f32 %v27, %v103
  %v105 = vpop.f32.mrb[0].mxu0
  %106 = vdwg.mxu0
  %v107 = vmax.f32 %v104, 0.0
  %v108 = vld [vmem:[%s3] sm:$0xff]
  %v109 = vld [vmem:[%s4] sm:$0x1]
  %v111 = vlaneseq
  %v112 = vshrl.u32 %v111, 7
  %v113 = vsub.s32 0, %v112
  %v114 = vrot.slane %v109, %v113
  %vm116 = vcmask 64512
  %v118 = vsel %vm116, %v107, 0
  %120 = vmatprep.subr.mxu0 0.0
  %121 = vmatpush1.msra.mxu0 %v108
  %122 = vmatprep.subr.mxu0 0.0
  %123 = vmatpush1.msra.mxu0 0.0
  %124 = vmatprep.subr.mxu0 0.0
  %125 = vmatpush1.msra.mxu0 0.0
  %126 = vmatprep.subr.mxu0 0.0
  %127 = vmatpush1.msra.mxu0 0.0
  %128 = vmatprep.subr.mxu0 0.0
  %129 = vmatpush1.msra.mxu0 0.0
  %130 = vmatprep.subr.mxu0 0.0
  %131 = vmatpush1.msra.mxu0 0.0
  %132 = vmatprep.subr.mxu0 0.0
  %133 = vmatpush1.msra.mxu0 0.0
  %134 = vmatprep.subr.mxu0 0.0
  %135 = vmatpush1.msra.mxu0 0.0
  %136 = vmatprep.subr.mxu0 0.0
  %137 = vmatpush1.msra.mxu0 0.0
  %138 = vmatprep.subr.mxu0 0.0
  %139 = vmatpush1.msra.mxu0 0.0
  %140 = vmatprep.subr.mxu0 0.0
  %141 = vmatpush1.msra.mxu0 0.0
  %142 = vmatprep.subr.mxu0 0.0
  %143 = vmatpush1.msra.mxu0 0.0
  %144 = vmatprep.subr.mxu0 0.0
  %145 = vmatpush1.msra.mxu0 0.0
  %146 = vmatprep.subr.mxu0 0.0
  %147 = vmatpush1.msra.mxu0 0.0
  %148 = vmatprep.subr.mxu0 0.0
  %149 = vmatpush1.msra.mxu0 0.0
  %150 = vmatprep.subr.mxu0 0.0
  %151 = vmatpush1.msra.mxu0 0.0
  %152 = vmatprep.subr.mxu0 0.0
  %153 = vmatpush1.msra.mxu0 0.0
  %154 = vmatprep.subr.mxu0 0.0
  %155 = vmatpush1.msra.mxu0 0.0
  %156 = vmatprep.subr.mxu0 0.0
  %157 = vmatpush1.msra.mxu0 0.0
  %158 = vmatprep.subr.mxu0 0.0
  %159 = vmatpush1.msra.mxu0 0.0
  %160 = vmatprep.subr.mxu0 0.0
  %161 = vmatpush1.msra.mxu0 0.0
  %162 = vmatprep.subr.mxu0 0.0
  %163 = vmatpush1.msra.mxu0 0.0
  %164 = vmatprep.subr.mxu0 0.0
  %165 = vmatpush1.msra.mxu0 0.0
  %166 = vmatprep.subr.mxu0 0.0
  %167 = vmatpush1.msra.mxu0 0.0
  %168 = vmatprep.subr.mxu0 0.0
  %169 = vmatpush1.msra.mxu0 0.0
  %170 = vmatprep.subr.mxu0 0.0
  %171 = vmatpush1.msra.mxu0 0.0
  %172 = vmatprep.subr.mxu0 0.0
  %173 = vmatpush1.msra.mxu0 0.0
  %174 = vmatprep.subr.mxu0 0.0
  %175 = vmatpush1.msra.mxu0 0.0
  %176 = vmatprep.subr.mxu0 0.0
  %177 = vmatpush1.msra.mxu0 0.0
  %178 = vmatprep.subr.mxu0 0.0
  %179 = vmatpush1.msra.mxu0 0.0
  %180 = vmatprep.subr.mxu0 0.0
  %181 = vmatpush1.msra.mxu0 0.0
  %182 = vmatprep.subr.mxu0 0.0
  %183 = vmatpush1.msra.mxu0 0.0
  %184 = vmatprep.mubr.f32.mxu0 0.0
  %185 = vmatmul.mubr.f32.gmra.mrb[0].mxu0 %v118
  %v186 = vpop.f32.mrb[0].mxu0
  %v187 = vadd.f32 %v114, %v186
  %v188 = vpop.f32.mrb[0].mxu0
  %189 = vdwg.mxu0
  %v190 = vmax.f32 %v187, 0.0
  %vm191 = vcmask 31744
  %192 = vst.msk [vmem:[%s5] sm:$0xff] %vm191, %v190
  // Predicated region
  $region22: #{tpu_custom_call.1} parent=0 // pred_check
    _
  $region23: #{tpu_custom_call.1} parent=0 // pred_check_branch
    %194 = sbr.rel (0) target = $region25
  $region24: #{tpu_custom_call.1} parent=0 // pred_region
    _
  $region25: #{tpu_custom_call.1} parent=0 // pred_fallthru
    _
  // Predicated region
  $region26: #{tpu_custom_call.1} parent=0 // pred_check
    _
  $region27: #{tpu_custom_call.1} parent=0 // pred_check_branch
    %196 = sbr.rel (0) target = $region29
  $region28: #{tpu_custom_call.1} parent=0 // pred_region
    _
  $region29: #{tpu_custom_call.1} parent=0 // pred_fallthru
    _

</llo_original>
